<compile_context>
chip_gen: v5e
topology: v5e:2x2
jax: 0.10.0
libtpu: 0.0.40
codegen_flags: <defaults>
</compile_context>

<pallas_src>
import math

import jax
import jax.numpy as jnp
from jax.experimental import pallas as pl
from jax.experimental.pallas import tpu as pltpu
import numpy as np


# ----------------------------------------------------------------------------
# Pallas kernel: single native-bf16 MXU matmul gather on the fused table.
# ----------------------------------------------------------------------------
def _swe_kernel(tok_ref, tab_ref, out_ref):
    # tok_ref : (1, TILE)        int32 token ids (lane-dense)
    # tab_ref : (d_proj, 2*K)    bf16 fused table; hi | lo halves stacked along K
    # out_ref : (d_proj, TILE)   f32 transposed output tile (unmasked lane-dense vst)
    tok = tok_ref[...]                                    # (1, TILE)
    tab = tab_ref[...]                                    # (d_proj, 2*K)
    k2 = tab.shape[1]
    k = k2 // 2
    tile = tok.shape[1]
    row_ids = jax.lax.broadcasted_iota(jnp.int32, (k2, tile), 0)
    # Stacked one-hot selects the same row from both the hi and lo halves.
    hit = (row_ids == tok) | (row_ids == (tok + k))       # (2*K, TILE) bool
    one_hot = hit.astype(jnp.float32).astype(jnp.bfloat16)
    # out[d, r] = hi[d, tok[r]] + lo[d, tok[r]]  (exact row select; f32 accum).
    out_ref[...] = jnp.dot(tab, one_hot, preferred_element_type=jnp.float32)


# ----------------------------------------------------------------------------
# One-time host-side fusion (hoisted out of the per-call forward).
# ----------------------------------------------------------------------------
def prepare_fused_table(emb_table, w_proj_t, emb_scale_val, *, vocab_pad=8):
    """fused[t, :] = (emb_table[t, :] @ W_proj.T) * scale, stored transposed with
    the vocab padded to a multiple of `vocab_pad`, then split into bf16 hi / lo
    residual halves stacked along the contraction axis: (d_proj, 2*n_token_pad)."""
    emb_np = np.asarray(emb_table, np.float64)
    n_token, d_embed = emb_np.shape
    if w_proj_t is None:
        d_proj = d_embed
        fused = emb_np * float(emb_scale_val)
    else:
        w_np = np.asarray(w_proj_t, np.float64)
        d_proj = w_np.shape[1]
        fused = (emb_np @ w_np) * float(emb_scale_val)

    n_token_pad = ((n_token + vocab_pad - 1) // vocab_pad) * vocab_pad
    fused_t = np.zeros((d_proj, n_token_pad), np.float32)
    fused_t[:, :n_token] = fused.T.astype(np.float32)

    fused_t = jnp.asarray(fused_t, jnp.float32)
    hi = fused_t.astype(jnp.bfloat16)
    lo = (fused_t - hi.astype(jnp.float32)).astype(jnp.bfloat16)
    table = jnp.concatenate([hi, lo], axis=1)             # (d_proj, 2*n_token_pad)
    return table


# ----------------------------------------------------------------------------
# Forward wrapper: token padding + pallas_call + small output transpose.
# ----------------------------------------------------------------------------
def structured_word_embedding_forward(tokens, fused_table, *, tile=512):
    """tokens: (B, S) int32; fused_table: (d_proj, 2*n_token_pad) bf16 from
    prepare_fused_table.  Returns (B, S, d_proj) float32."""
    assert tile % 128 == 0, "tile must be a multiple of 128 lanes"
    B, S = tokens.shape
    d_proj, k2 = fused_table.shape

    # Flatten tokens, pad to a tile multiple, present lane-dense as (1, N_pad).
    N = B * S
    n_pad = (-N) % tile
    tok_flat = jnp.reshape(tokens.astype(jnp.int32), (N,))
    if n_pad:
        tok_flat = jnp.concatenate([tok_flat, jnp.zeros((n_pad,), jnp.int32)])
    N_pad = N + n_pad
    tok_row = tok_flat.reshape(1, N_pad)
    n_tiles = N_pad // tile

    out_t = pl.pallas_call(
        _swe_kernel,
        out_shape=jax.ShapeDtypeStruct((d_proj, N_pad), jnp.float32),
        grid=(n_tiles,),
        in_specs=[
            pl.BlockSpec((1, tile), lambda i: (0, i)),        # token ids tile
            pl.BlockSpec((d_proj, k2), lambda i: (0, 0)),     # fused table (resident)
        ],
        out_specs=pl.BlockSpec((d_proj, tile), lambda i: (0, i)),
        compiler_params=pltpu.CompilerParams(
            dimension_semantics=("parallel",),
        ),
    )(tok_row, fused_table)

    # Layout plumbing back to (B, S, d_proj).
    out = jnp.transpose(out_t[:, :N]).reshape(B, S, d_proj)
    return out


# ----------------------------------------------------------------------------
# Deterministic parameter setup (mirrors StructuredWordEmbedding.__init__ /
# initialize_embeddings, but with JAX RNG instead of torch RNG).
# ----------------------------------------------------------------------------
def build_vocab():
    event2word = {}
    idx = 0
    for p in range(60, 68):
        event2word[f"Note_On_{p}"] = idx; idx += 1
    for p in range(60, 68):
        event2word[f"Note_Off_{p}"] = idx; idx += 1
    for d in range(1, 9):
        event2word[f"Duration_{d}"] = idx; idx += 1
    event2word["Bar_None"] = idx; idx += 1
    event2word["PAD_None"] = idx; idx += 1
    return event2word


def init_structured_embedding(key, event2word, d_embed):
    n_token = len(event2word)  # PAD_None is present
    pad_idx = event2word["PAD_None"]

    keys = jax.random.split(key, 8)
    # nn.Embedding default init: N(0, 1); padding row zeroed.
    w = np.array(jax.random.normal(keys[0], (n_token, d_embed), jnp.float32))
    w[pad_idx] = 0.0

    family_bases = {
        "Note_On":  np.array(jax.random.normal(keys[1], (d_embed,), jnp.float32)) * 0.02,
        "Note_Off": np.array(jax.random.normal(keys[2], (d_embed,), jnp.float32)) * 0.02,
        "Duration": np.array(jax.random.normal(keys[3], (d_embed,), jnp.float32)) * 0.02,
    }
    pitch_dir = np.array(jax.random.normal(keys[4], (d_embed,), jnp.float32))
    pitch_dir = pitch_dir / (np.linalg.norm(pitch_dir) + 1e-9)
    shift_dir = np.array(jax.random.normal(keys[5], (d_embed,), jnp.float32))
    shift_dir = shift_dir / (np.linalg.norm(shift_dir) + 1e-9)

    pert_key = keys[6]
    for token_str, idx in event2word.items():
        pert_key, sub = jax.random.split(pert_key)
        pert = np.array(jax.random.normal(sub, (d_embed,), jnp.float32)) * 0.01
        if token_str.startswith("Note_On"):
            pitch = int(token_str.split("_")[2])
            w[idx] = family_bases["Note_On"] + pert + (pitch - 60.0) * 0.001 * pitch_dir
        elif token_str.startswith("Note_Off"):
            pitch = int(token_str.split("_")[2])
            w[idx] = family_bases["Note_Off"] + pert + (pitch - 60.0) * 0.001 * pitch_dir
        elif token_str.startswith("Duration"):
            shift_val = int(token_str.split("_")[-1])
            w[idx] = (family_bases["Duration"] + pert
                      + math.log(shift_val + 1.0) * 0.001 * shift_dir)
        # other tokens (Bar_None, PAD_None) keep their default-init rows

    norms = np.linalg.norm(w, axis=-1, keepdims=True) + 1e-6
    w = w / norms
    return jnp.asarray(w, jnp.float32)


def init_proj_weight(key, d_embed, d_proj):
    # nn.Linear(d_embed, d_proj, bias=False): weight shape (d_proj, d_embed),
    # kaiming-uniform-ish bound 1/sqrt(fan_in).
    bound = 1.0 / math.sqrt(d_embed)
    w = jax.random.uniform(key, (d_proj, d_embed), jnp.float32, -bound, bound)
    return w


# ----------------------------------------------------------------------------
if __name__ == "__main__":
    key = jax.random.PRNGKey(0)
    k_emb, k_proj, k_tok = jax.random.split(key, 3)

    event2word = build_vocab()
    n_token = len(event2word)
    d_embed = 32
    d_proj = 16            # d_proj != d_embed -> projection path is exercised
    emb_scale = d_proj ** 0.5

    emb_table = init_structured_embedding(k_emb, event2word, d_embed)   # (n_token, d_embed)
    w_proj = init_proj_weight(k_proj, d_embed, d_proj)                  # (d_proj, d_embed)
    w_proj_t = jnp.transpose(w_proj)                                    # (d_embed, d_proj)

    # N = 1024 -> exactly 2 tiles at tile=512, so v7x megacore has 2 even shards.
    B, S = 4, 256
    tokens = jax.random.randint(k_tok, (B, S), 0, n_token, dtype=jnp.int32)

    # One-time host-side fusion (hoisted out of the forward path).
    fused_table = prepare_fused_table(emb_table, w_proj_t, emb_scale)
    fused_table = jax.block_until_ready(fused_table)

    out = structured_word_embedding_forward(tokens, fused_table, tile=512)
    out = jax.block_until_ready(out)

    # Pure-JAX reference (module math: lookup -> projection -> scale).
    ref = jnp.einsum(
        "bse,ep->bsp",
        jnp.take(emb_table, tokens, axis=0), w_proj_t,
        precision=jax.lax.Precision.HIGHEST,
    ) * emb_scale
    np.testing.assert_allclose(np.asarray(out), np.asarray(ref), rtol=1e-5, atol=1e-5)
    assert out.shape == (B, S, d_proj) and out.dtype == jnp.float32

    # Also exercise the d_proj == d_embed path (module skips the projection).
    fused_table_np = prepare_fused_table(emb_table, None, d_embed ** 0.5)
    out_noproj = structured_word_embedding_forward(tokens, fused_table_np, tile=512)
    out_noproj = jax.block_until_ready(out_noproj)
    ref_noproj = jnp.take(emb_table, tokens, axis=0) * (d_embed ** 0.5)
    np.testing.assert_allclose(np.asarray(out_noproj), np.asarray(ref_noproj),
                               rtol=1e-5, atol=1e-5)

    print("KERNEL_OK")
</pallas_src>

<mosaic_0001>
module attributes {stable_mosaic.version = 11 : i64} {
  func.func @_swe_kernel(%arg0: i32, %arg1: memref<1x512xi32, #tpu.memory_space<vmem>>, %arg2: memref<16x64xbf16, #tpu.memory_space<vmem>>, %arg3: memref<16x512xf32, #tpu.memory_space<vmem>>) attributes {dimension_semantics = [#tpu.dimension_semantics<parallel>], iteration_bounds = array<i64: 2>, scalar_prefetch = 0 : i64, scratch_operands = 0 : i64, tpu.core_type = #tpu.core_type<tc>, window_params = [{transform_indices = @transform_0, window_bounds = array<i64: 1, 512>}, {pipeline_mode = #tpu.pipeline_mode<synchronous>, transform_indices = @transform_1, window_bounds = array<i64: 16, 64>}, {transform_indices = @transform_2, window_bounds = array<i64: 16, 512>}]} {
    %c0 = arith.constant 0 : index
    %c0_0 = arith.constant 0 : index
    %0 = vector.load %arg1[%c0, %c0_0] : memref<1x512xi32, #tpu.memory_space<vmem>>, vector<1x512xi32>
    %c0_1 = arith.constant 0 : index
    %c0_2 = arith.constant 0 : index
    %1 = vector.load %arg2[%c0_1, %c0_2] : memref<16x64xbf16, #tpu.memory_space<vmem>>, vector<16x64xbf16>
    %2 = tpu.iota {dimensions = array<i32: 0>} : vector<64x512xi32>
    %3 = vector.broadcast %0 : vector<1x512xi32> to vector<64x512xi32>
    %4 = arith.cmpi eq, %2, %3 : vector<64x512xi32>
    %c32_i32 = arith.constant 32 : i32
    %5 = vector.broadcast %c32_i32 : i32 to vector<1x512xi32>
    %6 = arith.addi %0, %5 : vector<1x512xi32>
    %7 = vector.broadcast %6 : vector<1x512xi32> to vector<64x512xi32>
    %8 = arith.cmpi eq, %2, %7 : vector<64x512xi32>
    %9 = arith.ori %4, %8 : vector<64x512xi1>
    %10 = arith.extui %9 : vector<64x512xi1> to vector<64x512xi32>
    %11 = arith.sitofp %10 : vector<64x512xi32> to vector<64x512xf32>
    %12 = arith.truncf %11 : vector<64x512xf32> to vector<64x512xbf16>
    %cst = arith.constant dense<0.000000e+00> : vector<16x512xf32>
    %13 = tpu.matmul %1, %12, %cst {dimension_numbers = #tpu.dot_dimension_numbers<[1], [0], [0], [1], [0, 0, 1, 1], [], []>} : vector<16x64xbf16>, vector<64x512xbf16>, vector<16x512xf32> -> vector<16x512xf32>
    %c0_3 = arith.constant 0 : index
    %c0_4 = arith.constant 0 : index
    %14 = vector.load %arg3[%c0_3, %c0_4] : memref<16x512xf32, #tpu.memory_space<vmem>>, vector<16x512xf32>
    tpu.vector_store %arg3[%c0_3, %c0_4], %13 {strides = array<i32>} : memref<16x512xf32, #tpu.memory_space<vmem>>, vector<16x512xf32>,
    return
  }
  func.func @transform_0(%arg0: i32) -> (i32, i32) {
    %c0_i32 = arith.constant 0 : i32
    %c0_i32_0 = arith.constant 0 : i32
    return %c0_i32, %arg0 : i32, i32
  }
  func.func @transform_1(%arg0: i32) -> (i32, i32) {
    %c0_i32 = arith.constant 0 : i32
    %c0_i32_0 = arith.constant 0 : i32
    %c0_i32_1 = arith.constant 0 : i32
    return %c0_i32, %c0_i32_0 : i32, i32
  }
  func.func @transform_2(%arg0: i32) -> (i32, i32) {
    %c0_i32 = arith.constant 0 : i32
    %c0_i32_0 = arith.constant 0 : i32
    return %c0_i32, %arg0 : i32, i32
  }
}

</mosaic_0001>

<llo_original>
// kernel: tpu_custom_call.1
$region0: #{tpu_custom_call.1}
  #allocation0 [shape = 'u32[]', space=smem, size = 0x4, offset = 0x4, fixed_abs, tag = 'smem constant byte address 0x4 - core index']
  #allocation1 [shape = 'u32[72,128]{1,0:T(1,128)}', space=vmem, size = 0x9000, scoped, tag = 'internal scratch']
  %s0 = inlined_call_operand.hbm [shape: s32[1,1024], index: 0, kind: input, shape index: {}]
  %s1 = inlined_call_operand.hbm [shape: bf16[16,64], index: 1, kind: input, shape index: {}]
  %s2 = inlined_call_operand.hbm [shape: f32[16,1024], index: 2, kind: output, shape index: {}]
  %s3 = sld [smem:[#allocation0]]
  $region49: #{tpu_custom_call.1} parent=0
    _
  %s5 = ssub.s32 1, %s3
  %s6 = scalar_select 0, %s5, %s3
  $region1: #{tpu_custom_call.1} parent=0
    #allocation2 [shape = 'u8[4096]{0}', space=vmem, size = 0x1000, scoped, tag = 'input window, operand 0']
    #allocation3 [shape = 's32[2]{0}', space=sflag, size = 0x8, scoped, tag = 'scoped memory for tpu_custom_call.1']
    #allocation4 [shape = 's32[2]{0}', space=sflag, size = 0x8, scoped, tag = 'scoped memory for tpu_custom_call.1']
    #allocation5 [shape = 'u8[4096]{0}', space=vmem, size = 0x1000, scoped, tag = 'input window, operand 1, single buffered']
    #allocation6 [shape = 's32[1]{0}', space=sflag, size = 0x4, scoped, tag = 'scoped memory for tpu_custom_call.1']
    #allocation7 [shape = 'u8[65536]{0}', space=vmem, size = 0x10000, scoped, tag = 'output window, operand 0']
    %7 = vsyncpa [#allocation3], 0
    %s8 = scalar_lea.sflag [#allocation3], 1
    %9 = vsyncpa %s8, 0
    %10 = vsyncpa [#allocation6], 0
    %11 = vsyncpa [#allocation4], 0
    %s12 = scalar_lea.sflag [#allocation4], 1
    %13 = vsyncpa %s12, 0
    loop: start=0, step=1, limit=4
    $region2: #{tpu_custom_call.1} parent=1 // loop_pre_header
      _
    $region3: #{tpu_custom_call.1} parent=1 // loop_header
      %s15 = sphi 0, %s19
      %p16 = scmp.ge.s32.totalorder %s15, 4
      %s25 = sphi 0, %s27
      %s28 = sphi 0, %s25
      %s29 = sphi 0, %s28
      %s45 = sphi 0, %s29
      %s49 = sphi 0, %s49
      %s51 = sphi 0, %s49
      %s52 = sphi 0, %s51
      %s66 = sphi 0, %s52
      %s72 = sphi 0, %s74
      %s75 = sphi 0, %s72
      %s76 = sphi 0, %s75
      %s92 = sphi 0, %s76
    $region4: #{tpu_custom_call.1} parent=1 // loop_header_branch
      %18 = sbr.rel (%p16) target = $region8
    $region5: #{tpu_custom_call.1} parent=1 // loop_body
      %s20 = ssub.s32 %s15, 1
      %s21 = ssub.s32 %s15, 2
      %s22 = sadd.s32 %s15, 1
      %s23 = ssub.s32 %s15, %s22
      %p24 = scmp.eq.s32.totalorder %s23, 0
      %s26 = sadd.s32 %s25, 1
      %s27 = scalar_select %p24, %s25, %s26
      %p30 = pneg %p24
      %p31 = scmp.eq.s32.totalorder %s15, 1
      %p32 = por %p30, %p31
      %p33 = scmp.ne.s32.totalorder %s25, %s28
      %p34 = scmp.eq.s32.totalorder %s15, 0
      %p35 = por %p33, %p34
      %p36 = scmp.ne.s32.totalorder %s25, %s28
      %p37 = scmp.eq.s32.totalorder %s20, 1
      %p38 = por %p36, %p37
      %p39 = scmp.ne.s32.totalorder %s28, %s29
      %p40 = scmp.eq.s32.totalorder %s20, 0
      %p41 = por %p39, %p40
      %p42 = scmp.ne.s32.totalorder %s28, %s29
      %p43 = scmp.eq.s32.totalorder %s21, 1
      %p44 = por %p42, %p43
      %p46 = scmp.ne.s32.totalorder %s29, %s45
      %p47 = scmp.eq.s32.totalorder %s21, 0
      %p48 = por %p46, %p47
      %s50 = sadd.s32 %s49, 1
      %p53 = scmp.eq.s32.totalorder %s15, 1
      %p54 = scmp.ne.s32.totalorder %s49, %s51
      %p55 = scmp.eq.s32.totalorder %s15, 0
      %p56 = por %p54, %p55
      %p57 = scmp.ne.s32.totalorder %s49, %s51
      %p58 = scmp.eq.s32.totalorder %s20, 1
      %p59 = por %p57, %p58
      %p60 = scmp.ne.s32.totalorder %s51, %s52
      %p61 = scmp.eq.s32.totalorder %s20, 0
      %p62 = por %p60, %p61
      %p63 = scmp.ne.s32.totalorder %s51, %s52
      %p64 = scmp.eq.s32.totalorder %s21, 1
      %p65 = por %p63, %p64
      %p67 = scmp.ne.s32.totalorder %s52, %s66
      %p68 = scmp.eq.s32.totalorder %s21, 0
      %p69 = por %p67, %p68
      %s70 = ssub.s32 %s15, %s22
      %p71 = scmp.eq.s32.totalorder %s70, 0
      %s73 = sadd.s32 %s72, 1
      %s74 = scalar_select %p71, %s72, %s73
      %p77 = pneg %p71
      %p78 = scmp.eq.s32.totalorder %s15, 1
      %p79 = por %p77, %p78
      %p80 = scmp.ne.s32.totalorder %s72, %s75
      %p81 = scmp.eq.s32.totalorder %s15, 0
      %p82 = por %p80, %p81
      %p83 = scmp.ne.s32.totalorder %s72, %s75
      %p84 = scmp.eq.s32.totalorder %s20, 1
      %p85 = por %p83, %p84
      %p86 = scmp.ne.s32.totalorder %s75, %s76
      %p87 = scmp.eq.s32.totalorder %s20, 0
      %p88 = por %p86, %p87
      %p89 = scmp.ne.s32.totalorder %s75, %s76
      %p90 = scmp.eq.s32.totalorder %s21, 1
      %p91 = por %p89, %p90
      %p93 = scmp.ne.s32.totalorder %s76, %s92
      %p94 = scmp.eq.s32.totalorder %s21, 0
      %p95 = por %p93, %p94
      %p96 = scmp.le.s32.totalorder 1, %s15
      %p97 = scmp.lt.s32.totalorder %s15, 3
      %p98 = pnand %p96, %p97
      %p99 = pneg %p98
      // Predicated region
      $region9: #{tpu_custom_call.1} parent=5 // pred_check
        _
      $region10: #{tpu_custom_call.1} parent=5 // pred_check_branch
        %101 = sbr.rel (%p98) target = $region12
      $region11: #{tpu_custom_call.1} parent=5 // pred_region
        %s102 = ssub.s32 %s15, 1
        // Predicated region
        $region13: #{tpu_custom_call.1} parent=11 // pred_check
          %p103 = pneg %p62
        $region14: #{tpu_custom_call.1} parent=11 // pred_check_branch
          %105 = sbr.rel (%p103) target = $region16
        $region15: #{tpu_custom_call.1} parent=11 // pred_region
          %107 = vsyncadd [#allocation6], 0
          %s108 = sshll.u32 %s1, 4
          %s109 = int_to_ptr.hbm [resolvable:$true] %s108
          %s110 = sshll.u32 [#allocation5], 4
          %s111 = int_to_ptr.vmem [resolvable:$true] %s110
          %116 = dma.hbm_to_vmem [thread:$0]  %s109, 128, %s111, [#allocation6], 64, 64, 4
        $region16: #{tpu_custom_call.1} parent=11 // pred_fallthru
          _
      $region12: #{tpu_custom_call.1} parent=5 // pred_fallthru
        _
      %p117 = scmp.lt.s32.totalorder %s15, 2
      // Predicated region
      $region17: #{tpu_custom_call.1} parent=5 // pred_check
        %p118 = pneg %p117
      $region18: #{tpu_custom_call.1} parent=5 // pred_check_branch
        %120 = sbr.rel (%p118) target = $region20
      $region19: #{tpu_custom_call.1} parent=5 // pred_region
        // Predicated region
        $region21: #{tpu_custom_call.1} parent=19 // pred_check
          %p121 = pneg %p35
        $region22: #{tpu_custom_call.1} parent=19 // pred_check_branch
          %123 = sbr.rel (%p121) target = $region24
        $region23: #{tpu_custom_call.1} parent=19 // pred_region
          %s124 = sand.u32 %s25, 1
          %s125 = scalar_lea.sflag [#allocation3], %s124
          %s126 = sand.u32 %s25, 1
          %s127 = smul.addr %s126, 4
          %s128 = scalar_lea.vmem [#allocation2], %s127
          %s129 = smul.u32 4, %s15
          %131 = vsyncadd %s125, 0
          %s132 = scalar_lea.hbm %s0, %s129
          %s134 = sshll.u32 %s132, 4
          %s135 = int_to_ptr.hbm [resolvable:$true] %s134
          %s136 = sshll.u32 %s128, 4
          %s137 = int_to_ptr.vmem [resolvable:$true] %s136
          %139 = dma.hbm_to_vmem [thread:$0]  %s135, 64, %s137, %s125
        $region24: #{tpu_custom_call.1} parent=19 // pred_fallthru
          _
      $region20: #{tpu_custom_call.1} parent=5 // pred_fallthru
        _
      %p140 = scmp.le.s32.totalorder 1, %s15
      %p141 = scmp.lt.s32.totalorder %s15, 3
      %p142 = pnand %p140, %p141
      %p143 = pneg %p142
      // Predicated region
      $region25: #{tpu_custom_call.1} parent=5 // pred_check
        _
      $region26: #{tpu_custom_call.1} parent=5 // pred_check_branch
        %145 = sbr.rel (%p142) target = $region28
      $region27: #{tpu_custom_call.1} parent=5 // pred_region
        %s146 = ssub.s32 %s15, 1
        %s147 = sand.u32 %s28, 1
        %s148 = scalar_lea.sflag [#allocation3], %s147
        %s149 = sand.u32 %s28, 1
        %s150 = smul.addr %s149, 4
        %s151 = scalar_lea.vmem [#allocation2], %s150
        // Predicated region
        $region29: #{tpu_custom_call.1} parent=27 // pred_check
          %p152 = pneg %p41
        $region30: #{tpu_custom_call.1} parent=27 // pred_check_branch
          %154 = sbr.rel (%p152) target = $region32
        $region31: #{tpu_custom_call.1} parent=27 // pred_region
          %156 = dma.done %s148, 64
        $region32: #{tpu_custom_call.1} parent=27 // pred_fallthru
          _
        // Predicated region
        $region33: #{tpu_custom_call.1} parent=27 // pred_check
          %p157 = pneg %p62
        $region34: #{tpu_custom_call.1} parent=27 // pred_check_branch
          %159 = sbr.rel (%p157) target = $region36
        $region35: #{tpu_custom_call.1} parent=27 // pred_region
          %161 = dma.done [#allocation6], 128
        $region36: #{tpu_custom_call.1} parent=27 // pred_fallthru
          _
        %s162 = sand.u32 %s28, 1
        %s163 = scalar_lea.sflag [#allocation3], %s162
        %s164 = sand.u32 %s28, 1
        %s165 = smul.addr %s164, 4
        %s166 = scalar_lea.vmem [#allocation2], %s165
        %p167 = pneg %p41
        %p168 = pneg %p38
        %p169 = pneg %p62
        %p170 = pneg %p59
        %p171 = pneg %p88
        %p172 = pneg %p85
        %s173 = sand.u32 %s75, 1
        %s174 = scalar_lea.sflag [#allocation4], %s173
        %s175 = sand.u32 %s75, 1
        %s176 = smul.addr %s175, 64
        %s177 = scalar_lea.vmem [#allocation7], %s176
        %s178 = smul.u32 4, %s20
        %s179 = smul.u32 4, %s20
        %v181 = vld [vmem:[%s151] sm:$0xf]
        %v182 = vld [vmem:[#allocation5] sm:$0xf]
        %v183 = vld [vmem:[#allocation5 + $0x4] sm:$0xf]
        %v184 = vlaneseq
        %v185 = vshrl.u32 %v184, 7
        %v186 = vadd.s32 %v185, 8
        %v187 = vadd.s32 %v185, 16
        %v188 = vadd.s32 %v185, 24
        %v189 = vadd.s32 %v185, 32
        %v190 = vadd.s32 %v185, 40
        %v191 = vadd.s32 %v185, 48
        %v192 = vadd.s32 %v185, 56
        %v193 = vperm.slane %v181, 0
        %v194 = vperm.slane %v181, 1
        %v195 = vperm.slane %v181, 2
        %v196 = vperm.slane %v181, 3
        %vm197 = vcmp.eq.s32.totalorder %v185, %v193
        %vm198 = vcmp.eq.s32.totalorder %v185, %v194
        %vm199 = vcmp.eq.s32.totalorder %v185, %v195
        %vm200 = vcmp.eq.s32.totalorder %v185, %v196
        %vm201 = vcmp.eq.s32.totalorder %v186, %v193
        %vm202 = vcmp.eq.s32.totalorder %v186, %v194
        %vm203 = vcmp.eq.s32.totalorder %v186, %v195
        %vm204 = vcmp.eq.s32.totalorder %v186, %v196
        %vm205 = vcmp.eq.s32.totalorder %v187, %v193
        %vm206 = vcmp.eq.s32.totalorder %v187, %v194
        %vm207 = vcmp.eq.s32.totalorder %v187, %v195
        %vm208 = vcmp.eq.s32.totalorder %v187, %v196
        %vm209 = vcmp.eq.s32.totalorder %v188, %v193
        %vm210 = vcmp.eq.s32.totalorder %v188, %v194
        %vm211 = vcmp.eq.s32.totalorder %v188, %v195
        %vm212 = vcmp.eq.s32.totalorder %v188, %v196
        %vm213 = vcmp.eq.s32.totalorder %v189, %v193
        %vm214 = vcmp.eq.s32.totalorder %v189, %v194
        %vm215 = vcmp.eq.s32.totalorder %v189, %v195
        %vm216 = vcmp.eq.s32.totalorder %v189, %v196
        %vm217 = vcmp.eq.s32.totalorder %v190, %v193
        %vm218 = vcmp.eq.s32.totalorder %v190, %v194
        %vm219 = vcmp.eq.s32.totalorder %v190, %v195
        %vm220 = vcmp.eq.s32.totalorder %v190, %v196
        %vm221 = vcmp.eq.s32.totalorder %v191, %v193
        %vm222 = vcmp.eq.s32.totalorder %v191, %v194
        %vm223 = vcmp.eq.s32.totalorder %v191, %v195
        %vm224 = vcmp.eq.s32.totalorder %v191, %v196
        %vm225 = vcmp.eq.s32.totalorder %v192, %v193
        %vm226 = vcmp.eq.s32.totalorder %v192, %v194
        %vm227 = vcmp.eq.s32.totalorder %v192, %v195
        %vm228 = vcmp.eq.s32.totalorder %v192, %v196
        %v229 = vadd.s32 %v181, 32
        %v230 = vperm.slane %v229, 0
        %v231 = vperm.slane %v229, 1
        %v232 = vperm.slane %v229, 2
        %v233 = vperm.slane %v229, 3
        %vm234 = vcmp.eq.s32.totalorder %v185, %v230
        %vm235 = vcmp.eq.s32.totalorder %v185, %v231
        %vm236 = vcmp.eq.s32.totalorder %v185, %v232
        %vm237 = vcmp.eq.s32.totalorder %v185, %v233
        %vm238 = vcmp.eq.s32.totalorder %v186, %v230
        %vm239 = vcmp.eq.s32.totalorder %v186, %v231
        %vm240 = vcmp.eq.s32.totalorder %v186, %v232
        %vm241 = vcmp.eq.s32.totalorder %v186, %v233
        %vm242 = vcmp.eq.s32.totalorder %v187, %v230
        %vm243 = vcmp.eq.s32.totalorder %v187, %v231
        %vm244 = vcmp.eq.s32.totalorder %v187, %v232
        %vm245 = vcmp.eq.s32.totalorder %v187, %v233
        %vm246 = vcmp.eq.s32.totalorder %v188, %v230
        %vm247 = vcmp.eq.s32.totalorder %v188, %v231
        %vm248 = vcmp.eq.s32.totalorder %v188, %v232
        %vm249 = vcmp.eq.s32.totalorder %v188, %v233
        %vm250 = vcmp.eq.s32.totalorder %v189, %v230
        %vm251 = vcmp.eq.s32.totalorder %v189, %v231
        %vm252 = vcmp.eq.s32.totalorder %v189, %v232
        %vm253 = vcmp.eq.s32.totalorder %v189, %v233
        %vm254 = vcmp.eq.s32.totalorder %v190, %v230
        %vm255 = vcmp.eq.s32.totalorder %v190, %v231
        %vm256 = vcmp.eq.s32.totalorder %v190, %v232
        %vm257 = vcmp.eq.s32.totalorder %v190, %v233
        %vm258 = vcmp.eq.s32.totalorder %v191, %v230
        %vm259 = vcmp.eq.s32.totalorder %v191, %v231
        %vm260 = vcmp.eq.s32.totalorder %v191, %v232
        %vm261 = vcmp.eq.s32.totalorder %v191, %v233
        %vm262 = vcmp.eq.s32.totalorder %v192, %v230
        %vm263 = vcmp.eq.s32.totalorder %v192, %v231
        %vm264 = vcmp.eq.s32.totalorder %v192, %v232
        %vm265 = vcmp.eq.s32.totalorder %v192, %v233
        %vm266 = vmor %vm197, %vm234
        %vm267 = vmor %vm198, %vm235
        %vm268 = vmor %vm199, %vm236
        %vm269 = vmor %vm200, %vm237
        %vm270 = vmor %vm201, %vm238
        %vm271 = vmor %vm202, %vm239
        %vm272 = vmor %vm203, %vm240
        %vm273 = vmor %vm204, %vm241
        %vm274 = vmor %vm205, %vm242
        %vm275 = vmor %vm206, %vm243
        %vm276 = vmor %vm207, %vm244
        %vm277 = vmor %vm208, %vm245
        %vm278 = vmor %vm209, %vm246
        %vm279 = vmor %vm210, %vm247
        %vm280 = vmor %vm211, %vm248
        %vm281 = vmor %vm212, %vm249
        %vm282 = vmor %vm213, %vm250
        %vm283 = vmor %vm214, %vm251
        %vm284 = vmor %vm215, %vm252
        %vm285 = vmor %vm216, %vm253
        %vm286 = vmor %vm217, %vm254
        %vm287 = vmor %vm218, %vm255
        %vm288 = vmor %vm219, %vm256
        %vm289 = vmor %vm220, %vm257
        %vm290 = vmor %vm221, %vm258
        %vm291 = vmor %vm222, %vm259
        %vm292 = vmor %vm223, %vm260
        %vm293 = vmor %vm224, %vm261
        %vm294 = vmor %vm225, %vm262
        %vm295 = vmor %vm226, %vm263
        %vm296 = vmor %vm227, %vm264
        %vm297 = vmor %vm228, %vm265
        %v298 = vsel %vm266, 1, 0
        %v299 = vsel %vm267, 1, 0
        %v300 = vsel %vm268, 1, 0
        %v301 = vsel %vm269, 1, 0
        %v302 = vsel %vm270, 1, 0
        %v303 = vsel %vm271, 1, 0
        %v304 = vsel %vm272, 1, 0
        %v305 = vsel %vm273, 1, 0
        %v306 = vsel %vm274, 1, 0
        %v307 = vsel %vm275, 1, 0
        %v308 = vsel %vm276, 1, 0
        %v309 = vsel %vm277, 1, 0
        %v310 = vsel %vm278, 1, 0
        %v311 = vsel %vm279, 1, 0
        %v312 = vsel %vm280, 1, 0
        %v313 = vsel %vm281, 1, 0
        %v314 = vsel %vm282, 1, 0
        %v315 = vsel %vm283, 1, 0
        %v316 = vsel %vm284, 1, 0
        %v317 = vsel %vm285, 1, 0
        %v318 = vsel %vm286, 1, 0
        %v319 = vsel %vm287, 1, 0
        %v320 = vsel %vm288, 1, 0
        %v321 = vsel %vm289, 1, 0
        %v322 = vsel %vm290, 1, 0
        %v323 = vsel %vm291, 1, 0
        %v324 = vsel %vm292, 1, 0
        %v325 = vsel %vm293, 1, 0
        %v326 = vsel %vm294, 1, 0
        %v327 = vsel %vm295, 1, 0
        %v328 = vsel %vm296, 1, 0
        %v329 = vsel %vm297, 1, 0
        %v330 = vcvt.s32.f32 %v298
        %v331 = vcvt.s32.f32 %v299
        %v332 = vcvt.s32.f32 %v300
        %v333 = vcvt.s32.f32 %v301
        %v334 = vcvt.s32.f32 %v302
        %v335 = vcvt.s32.f32 %v303
        %v336 = vcvt.s32.f32 %v304
        %v337 = vcvt.s32.f32 %v305
        %v338 = vcvt.s32.f32 %v306
        %v339 = vcvt.s32.f32 %v307
        %v340 = vcvt.s32.f32 %v308
        %v341 = vcvt.s32.f32 %v309
        %v342 = vcvt.s32.f32 %v310
        %v343 = vcvt.s32.f32 %v311
        %v344 = vcvt.s32.f32 %v312
        %v345 = vcvt.s32.f32 %v313
        %v346 = vcvt.s32.f32 %v314
        %v347 = vcvt.s32.f32 %v315
        %v348 = vcvt.s32.f32 %v316
        %v349 = vcvt.s32.f32 %v317
        %v350 = vcvt.s32.f32 %v318
        %v351 = vcvt.s32.f32 %v319
        %v352 = vcvt.s32.f32 %v320
        %v353 = vcvt.s32.f32 %v321
        %v354 = vcvt.s32.f32 %v322
        %v355 = vcvt.s32.f32 %v323
        %v356 = vcvt.s32.f32 %v324
        %v357 = vcvt.s32.f32 %v325
        %v358 = vcvt.s32.f32 %v326
        %v359 = vcvt.s32.f32 %v327
        %v360 = vcvt.s32.f32 %v328
        %v361 = vcvt.s32.f32 %v329
        %v362 = vpack.c.bf16 %v334, %v330
        %v363 = vpack.c.bf16 %v335, %v331
        %v364 = vpack.c.bf16 %v336, %v332
        %v365 = vpack.c.bf16 %v337, %v333
        %v366 = vpack.c.bf16 %v342, %v338
        %v367 = vpack.c.bf16 %v343, %v339
        %v368 = vpack.c.bf16 %v344, %v340
        %v369 = vpack.c.bf16 %v345, %v341
        %v370 = vpack.c.bf16 %v350, %v346
        %v371 = vpack.c.bf16 %v351, %v347
        %v372 = vpack.c.bf16 %v352, %v348
        %v373 = vpack.c.bf16 %v353, %v349
        %v374 = vpack.c.bf16 %v358, %v354
        %v375 = vpack.c.bf16 %v359, %v355
        %v376 = vpack.c.bf16 %v360, %v356
        %v377 = vpack.c.bf16 %v361, %v357
        %v380 = vunpack.c.l.b16 %v182
        %v381 = vunpack.c.l.b16 %v183
        %v382 = vpack.c.b16 %v381, %v380
        %vm383 = vcmask 523264
        %v385 = vsel %vm383, %v382, 0
        %387 = vmatpush.bf16.msra.mxu0 0
        %388 = vmatpush.bf16.msra.mxu0 0
        %389 = vmatpush.bf16.msra.mxu0 0
        %390 = vmatpush.bf16.msra.mxu0 0
        %391 = vmatpush.bf16.msra.mxu0 %v374
        %392 = vmatpush.bf16.msra.mxu0 %v370
        %393 = vmatpush.bf16.msra.mxu0 %v366
        %394 = vmatpush.bf16.msra.mxu0 %v362
        %395 = vmatmul.bf16.gmra.mxu0 %v385
        %v396 = vpop.f32.mrf.mxu0
        %v397 = vadd.f32 0.0, %v396
        %v398 = vpop.f32.mrf.mxu0
        %v399 = vadd.f32 0.0, %v398
        %400 = vdwg.mxu0
        %401 = vmatpush.bf16.msra.mxu0 0
        %402 = vmatpush.bf16.msra.mxu0 0
        %403 = vmatpush.bf16.msra.mxu0 0
        %404 = vmatpush.bf16.msra.mxu0 0
        %405 = vmatpush.bf16.msra.mxu0 %v375
        %406 = vmatpush.bf16.msra.mxu0 %v371
        %407 = vmatpush.bf16.msra.mxu0 %v367
        %408 = vmatpush.bf16.msra.mxu0 %v363
        %409 = vmatmul.bf16.gmra.mxu0 %v385
        %v410 = vpop.f32.mrf.mxu0
        %v411 = vadd.f32 0.0, %v410
        %v412 = vpop.f32.mrf.mxu0
        %v413 = vadd.f32 0.0, %v412
        %414 = vdwg.mxu0
        %415 = vmatpush.bf16.msra.mxu0 0
        %416 = vmatpush.bf16.msra.mxu0 0
        %417 = vmatpush.bf16.msra.mxu0 0
        %418 = vmatpush.bf16.msra.mxu0 0
        %419 = vmatpush.bf16.msra.mxu0 %v376
        %420 = vmatpush.bf16.msra.mxu0 %v372
        %421 = vmatpush.bf16.msra.mxu0 %v368
        %422 = vmatpush.bf16.msra.mxu0 %v364
        %423 = vmatmul.bf16.gmra.mxu0 %v385
        %v424 = vpop.f32.mrf.mxu0
        %v425 = vadd.f32 0.0, %v424
        %v426 = vpop.f32.mrf.mxu0
        %v427 = vadd.f32 0.0, %v426
        %428 = vdwg.mxu0
        %429 = vmatpush.bf16.msra.mxu0 0
        %430 = vmatpush.bf16.msra.mxu0 0
        %431 = vmatpush.bf16.msra.mxu0 0
        %432 = vmatpush.bf16.msra.mxu0 0
        %433 = vmatpush.bf16.msra.mxu0 %v377
        %434 = vmatpush.bf16.msra.mxu0 %v373
        %435 = vmatpush.bf16.msra.mxu0 %v369
        %436 = vmatpush.bf16.msra.mxu0 %v365
        %437 = vmatmul.bf16.gmra.mxu0 %v385
        %v438 = vpop.f32.mrf.mxu0
        %v439 = vadd.f32 0.0, %v438
        %v440 = vpop.f32.mrf.mxu0
        %v441 = vadd.f32 0.0, %v440
        %442 = vdwg.mxu0
        %443 = vst [vmem:[%s177] sm:$0xff] %v397
        %444 = vst [vmem:[%s177 + $0x8] sm:$0xff] %v411
        %445 = vst [vmem:[%s177 + $0x10] sm:$0xff] %v425
        %446 = vst [vmem:[%s177 + $0x18] sm:$0xff] %v439
        %447 = vst [vmem:[%s177 + $0x20] sm:$0xff] %v399
        %448 = vst [vmem:[%s177 + $0x28] sm:$0xff] %v413
        %449 = vst [vmem:[%s177 + $0x30] sm:$0xff] %v427
        %450 = vst [vmem:[%s177 + $0x38] sm:$0xff] %v441
        %s451 = sand.u32 %s75, 1
        %s452 = scalar_lea.sflag [#allocation4], %s451
        %s453 = sand.u32 %s75, 1
        %s454 = smul.addr %s453, 64
        %s455 = scalar_lea.vmem [#allocation7], %s454
        // Predicated region
        $region37: #{tpu_custom_call.1} parent=27 // pred_check
          %p456 = pneg %p85
        $region38: #{tpu_custom_call.1} parent=27 // pred_check_branch
          %458 = sbr.rel (%p456) target = $region40
        $region39: #{tpu_custom_call.1} parent=27 // pred_region
          %s459 = smul.u32 4, %s20
          %461 = vsyncadd %s452, 0
          %s462 = smul.addr %s459, 8
          %s463 = scalar_lea.hbm %s2, %s462
          %s464 = sshll.u32 %s455, 4
          %s465 = int_to_ptr.vmem [resolvable:$true] %s464
          %s466 = sshll.u32 %s463, 4
          %s467 = int_to_ptr.hbm [resolvable:$true] %s466
          %472 = dma.vmem_to_hbm [thread:$0]  %s465, 1024, %s467, %s452, 512, 1024, 32
        $region40: #{tpu_custom_call.1} parent=27 // pred_fallthru
          _
      $region28: #{tpu_custom_call.1} parent=5 // pred_fallthru
        _
      %p473 = scmp.le.s32.totalorder 2, %s15
      // Predicated region
      $region41: #{tpu_custom_call.1} parent=5 // pred_check
        %p474 = pneg %p473
      $region42: #{tpu_custom_call.1} parent=5 // pred_check_branch
        %476 = sbr.rel (%p474) target = $region44
      $region43: #{tpu_custom_call.1} parent=5 // pred_region
        %s477 = ssub.s32 %s15, 2
        // Predicated region
        $region45: #{tpu_custom_call.1} parent=43 // pred_check
          %p478 = pneg %p91
        $region46: #{tpu_custom_call.1} parent=43 // pred_check_branch
          %480 = sbr.rel (%p478) target = $region48
        $region47: #{tpu_custom_call.1} parent=43 // pred_region
          %s481 = sand.u32 %s76, 1
          %s482 = scalar_lea.sflag [#allocation4], %s481
          %s483 = sand.u32 %s76, 1
          %s484 = smul.addr %s483, 64
          %s485 = scalar_lea.vmem [#allocation7], %s484
          %487 = dma.done %s482, 1024
        $region48: #{tpu_custom_call.1} parent=43 // pred_fallthru
          _
      $region44: #{tpu_custom_call.1} parent=5 // pred_fallthru
        _
    $region6: #{tpu_custom_call.1} parent=1 // loop_footer
      %s19 = sadd.s32 1, %s15
    $region7: #{tpu_custom_call.1} parent=1 // loop_footer_branch
      %14 = sbr.rel target = $region3
    $region8: #{tpu_custom_call.1} parent=1 // loop_exit
      _
    %488 = vsyncpa [#allocation3], 1
    %s489 = scalar_lea.sflag [#allocation3], 1
    %490 = vsyncpa %s489, 1
    %491 = vsyncpa [#allocation6], 1
    %492 = vsyncpa [#allocation4], 1
    %s493 = scalar_lea.sflag [#allocation4], 1
    %494 = vsyncpa %s493, 1

</llo_original>
